<compile_context>
chip_gen: v5e
topology: v5e:2x2
jax: 0.10.0
libtpu: 0.0.40
codegen_flags: <defaults>
</compile_context>

<pallas_src>
import functools

import jax
import jax.numpy as jnp
from jax import lax
from jax.experimental import pallas as pl
from jax.experimental.pallas import tpu as pltpu

EPS = 1e-5


def _double_conv_kernel(x_ref, w1_ref, b1_ref, w2_ref, b2_ref, o_ref, *, th, h_img):
    # x_ref : (1, H+2, W*Cin) bf16   -- whole H-padded image (resident across the h tiles)
    # w1_ref: (W*Cin, (W+2)*Cmid) bf16 (BN1 folded, conv2 W-padding baked into zero columns)
    # b1_ref: (1, (W+2)*Cmid) f32
    # w2_ref: (3, (W+2)*Cmid, W*Cout) bf16 (BN2 folded, banded per-kh 3x3 weights)
    # b2_ref: (1, W*Cout) f32
    # o_ref : (1, th, W*Cout) f32
    h = pl.program_id(1)
    row0 = pl.multiple_of(h * th, 8)

    # th+2 padded-image rows (1 halo row above and below the output tile).
    xs = x_ref[0, pl.ds(row0, th + 2), :]                      # (th+2, W*Cin) bf16

    # ---- conv 1x1 (+ folded BN) + ReLU: one lane-dense matmul ----
    z1 = jnp.dot(xs, w1_ref[...], preferred_element_type=jnp.float32) + b1_ref[...]
    h1 = jnp.maximum(z1, 0.0)                                  # (th+2, (W+2)*Cmid) f32

    # Rows that came from the global H zero-padding of the *input* must be true zeros for
    # conv2's padding (they would otherwise be relu(bias)).  Padded-row index = row0 + r.
    gr = lax.broadcasted_iota(jnp.int32, (th + 2, 1), 0) + row0
    hpad = jnp.where((gr >= 1) & (gr <= h_img), h1, 0.0)       # (th+2, (W+2)*Cmid)

    # ---- conv 3x3 (padding=1, + folded BN) + ReLU: 3 banded matmuls (one per kh tap) ----
    acc = jnp.zeros(o_ref.shape[1:], jnp.float32)              # (th, W*Cout)
    for kh in range(3):
        lhs = hpad[kh:kh + th, :].astype(jnp.bfloat16)         # row-shifted tap (th, (W+2)*Cmid)
        acc = acc + jnp.dot(lhs, w2_ref[kh], preferred_element_type=jnp.float32)

    o_ref[0] = jnp.maximum(acc + b2_ref[...], 0.0).astype(o_ref.dtype)


def _fold_and_pack_params(params, W):
    """Fold BN into the conv weights and build the lane-dense 'big' matrices."""
    w1, b1, bn1, w2, b2, bn2 = params
    Cin, Cmid = w1.shape
    Cout = w2.shape[3]

    g1, be1, m1, v1 = bn1
    s1 = g1 * lax.rsqrt(v1 + EPS)
    w1f = w1 * s1[None, :]                                   # (Cin, Cmid)
    b1f = b1[0] * s1 + (be1 - m1 * s1)                       # (Cmid,)

    g2, be2, m2, v2 = bn2
    s2 = g2 * lax.rsqrt(v2 + EPS)
    w2f = w2 * s2[None, None, None, :]                       # (3, 3, Cmid, Cout)
    b2f = b2[0] * s2 + (be2 - m2 * s2)                       # (Cout,)

    # conv1 as one matmul: lane w*Cin+c -> lane p*Cmid+cm with p = w+1 (border blocks p=0,W+1
    # stay zero = conv2's zero padding along W).
    place1 = jnp.eye(W, W + 2, k=1, dtype=jnp.float32)                       # (W, W+2)
    w1_big = jnp.kron(place1, w1f).astype(jnp.bfloat16)                      # (W*Cin, (W+2)*Cmid)
    b1_big = jnp.concatenate([jnp.zeros((Cmid,), jnp.float32),
                              jnp.tile(b1f, (W,)),
                              jnp.zeros((Cmid,), jnp.float32)])[None, :]     # (1, (W+2)*Cmid)

    # conv2: banded matrix per kh tap: B_kh[(w+kw)*Cmid+cm, w*Cout+co] = w2f[kh, kw, cm, co]
    bands = []
    for kh in range(3):
        Bkh = sum(jnp.kron(jnp.eye(W + 2, W, k=-kw, dtype=jnp.float32), w2f[kh, kw])
                  for kw in range(3))
        bands.append(Bkh)
    w2_big = jnp.stack(bands).astype(jnp.bfloat16)                           # (3, (W+2)*Cmid, W*Cout)
    b2_big = jnp.tile(b2f, (W,))[None, :]                                    # (1, W*Cout)
    return w1_big, b1_big, w2_big, b2_big


def double_conv_pallas(x_nchw, params):
    """x_nchw: (N, Cin, H, W) float32; returns (N, Cout, H, W) float32."""
    w1, _, _, w2, _, _ = params
    N, Cin, H, W = x_nchw.shape
    Cmid = w1.shape[1]
    Cout = w2.shape[3]

    th = 8 if H % 8 == 0 else H           # row-tile height (larger th amortizes per-step cost)
    nt = H // th

    w1_big, b1_big, w2_big, b2_big = _fold_and_pack_params(params, W)

    # NCHW -> lane-dense rows (N, H+2, W*Cin), one zero row top/bottom (conv2 H padding),
    # bf16 for the MXU.  (In an NHWC end-to-end model the transpose would be dropped.)
    x_rows = jnp.transpose(x_nchw, (0, 2, 3, 1)).reshape(N, H, W * Cin)
    x_pad = jnp.pad(x_rows, ((0, 0), (1, 1), (0, 0))).astype(jnp.bfloat16)

    kernel = functools.partial(_double_conv_kernel, th=th, h_img=H)

    # Explicit VMEM budget derived from the (double-buffered) block sizes, with headroom.
    block_bytes = 2 * ((H + 2) * W * Cin * 2
                       + W * Cin * (W + 2) * Cmid * 2
                       + 3 * (W + 2) * Cmid * W * Cout * 2
                       + ((W + 2) * Cmid + W * Cout) * 4
                       + th * W * Cout * 4)
    vmem_limit = int(min(max(4 * block_bytes, 8 * 1024 * 1024), 32 * 1024 * 1024))

    out_rows = pl.pallas_call(
        kernel,
        out_shape=jax.ShapeDtypeStruct((N, H, W * Cout), jnp.float32),
        grid_spec=pltpu.PrefetchScalarGridSpec(
            num_scalar_prefetch=0,
            grid=(N, nt),
            in_specs=[
                pl.BlockSpec((1, H + 2, W * Cin), lambda n, h: (n, 0, 0)),
                pl.BlockSpec((W * Cin, (W + 2) * Cmid), lambda n, h: (0, 0)),
                pl.BlockSpec((1, (W + 2) * Cmid), lambda n, h: (0, 0)),
                pl.BlockSpec((3, (W + 2) * Cmid, W * Cout), lambda n, h: (0, 0, 0)),
                pl.BlockSpec((1, W * Cout), lambda n, h: (0, 0)),
            ],
            out_specs=pl.BlockSpec((1, th, W * Cout), lambda n, h: (n, h, 0)),
        ),
        compiler_params=pltpu.CompilerParams(
            dimension_semantics=("parallel", "parallel"),
            vmem_limit_bytes=vmem_limit),
    )(x_pad, w1_big, b1_big, w2_big, b2_big)

    out = out_rows.reshape(N, H, W, Cout)
    return jnp.transpose(out, (0, 3, 1, 2))  # NHWC -> NCHW


def double_conv_ref(x_nchw, params):
    """Pure-JAX f32 reference matching the PyTorch module semantics."""
    w1, b1, bn1, w2, b2, bn2 = params
    x = jnp.transpose(x_nchw, (0, 2, 3, 1))
    dn = ('NHWC', 'HWIO', 'NHWC')

    z1 = lax.conv_general_dilated(x, w1[None, None], (1, 1), 'VALID',
                                  dimension_numbers=dn) + b1[0]
    g1, be1, m1, v1 = bn1
    z1 = g1 * (z1 - m1) * lax.rsqrt(v1 + EPS) + be1
    h1 = jnp.maximum(z1, 0.0)

    z2 = lax.conv_general_dilated(h1, w2, (1, 1), 'SAME',
                                  dimension_numbers=dn) + b2[0]
    g2, be2, m2, v2 = bn2
    z2 = g2 * (z2 - m2) * lax.rsqrt(v2 + EPS) + be2
    y = jnp.maximum(z2, 0.0)
    return jnp.transpose(y, (0, 3, 1, 2))


def init_params(key, in_ch, mid_ch, out_ch):
    c_in_total = in_ch + mid_ch
    ks = jax.random.split(key, 8)
    w1 = jax.random.normal(ks[0], (c_in_total, mid_ch), jnp.float32) * 0.2
    b1 = jax.random.normal(ks[1], (1, mid_ch), jnp.float32) * 0.1
    w2 = jax.random.normal(ks[2], (3, 3, mid_ch, out_ch), jnp.float32) * 0.2
    b2 = jax.random.normal(ks[3], (1, out_ch), jnp.float32) * 0.1
    # BN params packed as rows: [gamma, beta, running_mean, running_var]
    bn1 = jnp.stack([
        1.0 + 0.1 * jax.random.normal(ks[4], (mid_ch,), jnp.float32),
        0.1 * jax.random.normal(ks[5], (mid_ch,), jnp.float32),
        0.05 * jnp.arange(mid_ch, dtype=jnp.float32),
        1.0 + 0.01 * jnp.arange(mid_ch, dtype=jnp.float32),
    ])
    bn2 = jnp.stack([
        1.0 + 0.1 * jax.random.normal(ks[6], (out_ch,), jnp.float32),
        0.1 * jax.random.normal(ks[7], (out_ch,), jnp.float32),
        0.05 * jnp.arange(out_ch, dtype=jnp.float32),
        1.0 + 0.01 * jnp.arange(out_ch, dtype=jnp.float32),
    ])
    return (w1, b1, bn1, w2, b2, bn2)


if __name__ == "__main__":
    in_ch, mid_ch, out_ch = 4, 8, 16
    N, H, W = 2, 16, 16

    key = jax.random.PRNGKey(0)
    kx, kp = jax.random.split(key)
    x = jax.random.normal(kx, (N, in_ch + mid_ch, H, W), jnp.float32)  # NCHW, like PyTorch
    params = init_params(kp, in_ch, mid_ch, out_ch)

    y = double_conv_pallas(x, params)
    y = jax.block_until_ready(y)

    y_ref = double_conv_ref(x, params)
    assert y.shape == (N, out_ch, H, W)
    # Kernel uses bf16 MXU inputs (f32 accumulation); compare against the f32 reference with
    # a tolerance that comfortably covers bf16 rounding through the two convs.
    assert jnp.allclose(y, y_ref, atol=1e-1, rtol=1e-1), "mismatch vs JAX reference"

    print("KERNEL_OK")
</pallas_src>

<mosaic_0001>
module attributes {stable_mosaic.version = 11 : i64} {
  func.func @_double_conv_kernel(%arg0: i32, %arg1: i32, %arg2: memref<1x18x192xbf16, #tpu.memory_space<vmem>>, %arg3: memref<192x144xbf16, #tpu.memory_space<vmem>>, %arg4: memref<1x144xf32, #tpu.memory_space<vmem>>, %arg5: memref<3x144x256xbf16, #tpu.memory_space<vmem>>, %arg6: memref<1x256xf32, #tpu.memory_space<vmem>>, %arg7: memref<1x8x256xf32, #tpu.memory_space<vmem>>) attributes {dimension_semantics = [#tpu.dimension_semantics<parallel>, #tpu.dimension_semantics<parallel>], iteration_bounds = array<i64: 2, 2>, scalar_prefetch = 0 : i64, scratch_operands = 0 : i64, tpu.core_type = #tpu.core_type<tc>, window_params = [{transform_indices = @transform_0, window_bounds = array<i64: 1, 18, 192>}, {pipeline_mode = #tpu.pipeline_mode<synchronous>, transform_indices = @transform_1, window_bounds = array<i64: 192, 144>}, {pipeline_mode = #tpu.pipeline_mode<synchronous>, transform_indices = @transform_2, window_bounds = array<i64: 1, 144>}, {pipeline_mode = #tpu.pipeline_mode<synchronous>, transform_indices = @transform_3, window_bounds = array<i64: 3, 144, 256>}, {pipeline_mode = #tpu.pipeline_mode<synchronous>, transform_indices = @transform_4, window_bounds = array<i64: 1, 256>}, {transform_indices = @transform_5, window_bounds = array<i64: 1, 8, 256>}]} {
    %c8_i32 = arith.constant 8 : i32
    %0 = arith.muli %arg1, %c8_i32 : i32
    %1 = tpu.assume_multiple %0, 8 : i32
    %c0 = arith.constant 0 : index
    %2 = arith.index_cast %1 : i32 to index
    %c0_0 = arith.constant 0 : index
    %3 = vector.load %arg2[%c0, %2, %c0_0] : memref<1x18x192xbf16, #tpu.memory_space<vmem>>, vector<1x10x192xbf16>
    %4 = vector.shape_cast %3 : vector<1x10x192xbf16> to vector<10x192xbf16>
    %c0_1 = arith.constant 0 : index
    %c0_2 = arith.constant 0 : index
    %5 = vector.load %arg3[%c0_1, %c0_2] : memref<192x144xbf16, #tpu.memory_space<vmem>>, vector<192x144xbf16>
    %cst = arith.constant dense<0.000000e+00> : vector<10x144xf32>
    %6 = tpu.matmul %4, %5, %cst {dimension_numbers = #tpu.dot_dimension_numbers<[1], [0], [0], [1], [0, 0, 1, 1], [], []>} : vector<10x192xbf16>, vector<192x144xbf16>, vector<10x144xf32> -> vector<10x144xf32>
    %c0_3 = arith.constant 0 : index
    %c0_4 = arith.constant 0 : index
    %7 = vector.load %arg4[%c0_3, %c0_4] : memref<1x144xf32, #tpu.memory_space<vmem>>, vector<1x144xf32>
    %8 = vector.broadcast %7 : vector<1x144xf32> to vector<10x144xf32>
    %9 = arith.addf %6, %8 : vector<10x144xf32>
    %cst_5 = arith.constant 0.000000e+00 : f32
    %10 = vector.broadcast %cst_5 : f32 to vector<10x144xf32>
    %11 = arith.maximumf %9, %10 : vector<10x144xf32>
    %12 = tpu.iota {dimensions = array<i32: 0>} : vector<10x1xi32>
    %13 = vector.broadcast %1 : i32 to vector<10x1xi32>
    %14 = arith.addi %12, %13 : vector<10x1xi32>
    %c1_i32 = arith.constant 1 : i32
    %15 = vector.broadcast %c1_i32 : i32 to vector<10x1xi32>
    %16 = arith.cmpi sge, %14, %15 : vector<10x1xi32>
    %c16_i32 = arith.constant 16 : i32
    %17 = vector.broadcast %c16_i32 : i32 to vector<10x1xi32>
    %18 = arith.cmpi sle, %14, %17 : vector<10x1xi32>
    %19 = arith.andi %16, %18 : vector<10x1xi1>
    %cst_6 = arith.constant 0.000000e+00 : f32
    %20 = vector.shape_cast %19 : vector<10x1xi1> to vector<10x1xi1>
    %21 = vector.broadcast %20 : vector<10x1xi1> to vector<10x144xi1>
    %22 = vector.broadcast %cst_6 : f32 to vector<10x144xf32>
    %23 = arith.select %21, %11, %22 : vector<10x144xi1>, vector<10x144xf32>
    %cst_7 = arith.constant 0.000000e+00 : f32
    %24 = vector.broadcast %cst_7 : f32 to vector<8x256xf32>
    %25 = vector.extract_strided_slice %23 {offsets = [0, 0], sizes = [8, 144], strides = [1, 1]} : vector<10x144xf32> to vector<8x144xf32>
    %26 = arith.truncf %25 : vector<8x144xf32> to vector<8x144xbf16>
    %c0_8 = arith.constant 0 : index
    %c0_9 = arith.constant 0 : index
    %c0_10 = arith.constant 0 : index
    %27 = vector.load %arg5[%c0_8, %c0_9, %c0_10] : memref<3x144x256xbf16, #tpu.memory_space<vmem>>, vector<1x144x256xbf16>
    %28 = vector.shape_cast %27 : vector<1x144x256xbf16> to vector<144x256xbf16>
    %cst_11 = arith.constant dense<0.000000e+00> : vector<8x256xf32>
    %29 = tpu.matmul %26, %28, %cst_11 {dimension_numbers = #tpu.dot_dimension_numbers<[1], [0], [0], [1], [0, 0, 1, 1], [], []>} : vector<8x144xbf16>, vector<144x256xbf16>, vector<8x256xf32> -> vector<8x256xf32>
    %30 = arith.addf %24, %29 : vector<8x256xf32>
    %31 = vector.extract_strided_slice %23 {offsets = [1, 0], sizes = [8, 144], strides = [1, 1]} : vector<10x144xf32> to vector<8x144xf32>
    %32 = arith.truncf %31 : vector<8x144xf32> to vector<8x144xbf16>
    %c1 = arith.constant 1 : index
    %c0_12 = arith.constant 0 : index
    %c0_13 = arith.constant 0 : index
    %33 = vector.load %arg5[%c1, %c0_12, %c0_13] : memref<3x144x256xbf16, #tpu.memory_space<vmem>>, vector<1x144x256xbf16>
    %34 = vector.shape_cast %33 : vector<1x144x256xbf16> to vector<144x256xbf16>
    %cst_14 = arith.constant dense<0.000000e+00> : vector<8x256xf32>
    %35 = tpu.matmul %32, %34, %cst_14 {dimension_numbers = #tpu.dot_dimension_numbers<[1], [0], [0], [1], [0, 0, 1, 1], [], []>} : vector<8x144xbf16>, vector<144x256xbf16>, vector<8x256xf32> -> vector<8x256xf32>
    %36 = arith.addf %30, %35 : vector<8x256xf32>
    %37 = vector.extract_strided_slice %23 {offsets = [2, 0], sizes = [8, 144], strides = [1, 1]} : vector<10x144xf32> to vector<8x144xf32>
    %38 = arith.truncf %37 : vector<8x144xf32> to vector<8x144xbf16>
    %c2 = arith.constant 2 : index
    %c0_15 = arith.constant 0 : index
    %c0_16 = arith.constant 0 : index
    %39 = vector.load %arg5[%c2, %c0_15, %c0_16] : memref<3x144x256xbf16, #tpu.memory_space<vmem>>, vector<1x144x256xbf16>
    %40 = vector.shape_cast %39 : vector<1x144x256xbf16> to vector<144x256xbf16>
    %cst_17 = arith.constant dense<0.000000e+00> : vector<8x256xf32>
    %41 = tpu.matmul %38, %40, %cst_17 {dimension_numbers = #tpu.dot_dimension_numbers<[1], [0], [0], [1], [0, 0, 1, 1], [], []>} : vector<8x144xbf16>, vector<144x256xbf16>, vector<8x256xf32> -> vector<8x256xf32>
    %42 = arith.addf %36, %41 : vector<8x256xf32>
    %c0_18 = arith.constant 0 : index
    %c0_19 = arith.constant 0 : index
    %43 = vector.load %arg6[%c0_18, %c0_19] : memref<1x256xf32, #tpu.memory_space<vmem>>, vector<1x256xf32>
    %44 = vector.broadcast %43 : vector<1x256xf32> to vector<8x256xf32>
    %45 = arith.addf %42, %44 : vector<8x256xf32>
    %cst_20 = arith.constant 0.000000e+00 : f32
    %46 = vector.broadcast %cst_20 : f32 to vector<8x256xf32>
    %47 = arith.maximumf %45, %46 : vector<8x256xf32>
    %c0_21 = arith.constant 0 : index
    %c0_22 = arith.constant 0 : index
    %c0_23 = arith.constant 0 : index
    %48 = vector.load %arg7[%c0_21, %c0_22, %c0_23] : memref<1x8x256xf32, #tpu.memory_space<vmem>>, vector<1x8x256xf32>
    %49 = vector.shape_cast %48 : vector<1x8x256xf32> to vector<8x256xf32>
    %50 = vector.shape_cast %47 : vector<8x256xf32> to vector<1x8x256xf32>
    tpu.vector_store %arg7[%c0_21, %c0_22, %c0_23], %50 {strides = array<i32>} : memref<1x8x256xf32, #tpu.memory_space<vmem>>, vector<1x8x256xf32>,
    return
  }
  func.func @transform_0(%arg0: i32, %arg1: i32) -> (i32, i32, i32) {
    %c0_i32 = arith.constant 0 : i32
    %c0_i32_0 = arith.constant 0 : i32
    %c0_i32_1 = arith.constant 0 : i32
    return %arg0, %c0_i32, %c0_i32_0 : i32, i32, i32
  }
  func.func @transform_1(%arg0: i32, %arg1: i32) -> (i32, i32) {
    %c0_i32 = arith.constant 0 : i32
    %c0_i32_0 = arith.constant 0 : i32
    %c0_i32_1 = arith.constant 0 : i32
    return %c0_i32, %c0_i32_0 : i32, i32
  }
  func.func @transform_2(%arg0: i32, %arg1: i32) -> (i32, i32) {
    %c0_i32 = arith.constant 0 : i32
    %c0_i32_0 = arith.constant 0 : i32
    %c0_i32_1 = arith.constant 0 : i32
    return %c0_i32, %c0_i32_0 : i32, i32
  }
  func.func @transform_3(%arg0: i32, %arg1: i32) -> (i32, i32, i32) {
    %c0_i32 = arith.constant 0 : i32
    %c0_i32_0 = arith.constant 0 : i32
    %c0_i32_1 = arith.constant 0 : i32
    %c0_i32_2 = arith.constant 0 : i32
    return %c0_i32, %c0_i32_0, %c0_i32_1 : i32, i32, i32
  }
  func.func @transform_4(%arg0: i32, %arg1: i32) -> (i32, i32) {
    %c0_i32 = arith.constant 0 : i32
    %c0_i32_0 = arith.constant 0 : i32
    %c0_i32_1 = arith.constant 0 : i32
    return %c0_i32, %c0_i32_0 : i32, i32
  }
  func.func @transform_5(%arg0: i32, %arg1: i32) -> (i32, i32, i32) {
    %c0_i32 = arith.constant 0 : i32
    %c0_i32_0 = arith.constant 0 : i32
    return %arg0, %arg1, %c0_i32 : i32, i32, i32
  }
}

</mosaic_0001>

<llo_original>
// kernel: tpu_custom_call.1
$region0: #{tpu_custom_call.1}
  #allocation0 [shape = 'u32[]', space=smem, size = 0x4, offset = 0x4, fixed_abs, tag = 'smem constant byte address 0x4 - core index']
  #allocation1 [shape = 'u32[72,128]{1,0:T(1,128)}', space=vmem, size = 0x9000, scoped, tag = 'internal scratch']
  %s0 = inlined_call_operand.vmem [shape: bf16[2,18,192], index: 0, kind: input, shape index: {}]
  %s1 = inlined_call_operand.vmem [shape: bf16[192,144], index: 1, kind: input, shape index: {}]
  %s2 = inlined_call_operand.vmem [shape: f32[1,144], index: 2, kind: input, shape index: {}]
  %s3 = inlined_call_operand.hbm [shape: bf16[3,144,256], index: 3, kind: input, shape index: {}]
  %s4 = inlined_call_operand.vmem [shape: f32[1,256], index: 4, kind: input, shape index: {}]
  %s5 = inlined_call_operand.hbm [shape: f32[2,16,256], index: 5, kind: output, shape index: {}]
  %s6 = sld [smem:[#allocation0]]
  $region57: #{tpu_custom_call.1} parent=0
    _
  %s8 = ssub.s32 1, %s6
  %s9 = scalar_select 0, %s8, %s6
  $region1: #{tpu_custom_call.1} parent=0
    #allocation2 [shape = 'u8[221184]{0}', space=vmem, size = 0x36000, scoped, tag = 'input window, operand 3, single buffered']
    #allocation3 [shape = 's32[2]{0}', space=sflag, size = 0x8, scoped, tag = 'scoped memory for tpu_custom_call.1']
    #allocation4 [shape = 's32[2]{0}', space=sflag, size = 0x8, scoped, tag = 'scoped memory for tpu_custom_call.1']
    #allocation5 [shape = 'u8[16384]{0}', space=vmem, size = 0x4000, scoped, tag = 'output window, operand 0']
    %10 = vsyncpa [#allocation3], 0
    %11 = vsyncpa [#allocation4], 0
    %s12 = scalar_lea.sflag [#allocation4], 1
    %13 = vsyncpa %s12, 0
    loop: start=0, step=1, limit=6
    $region2: #{tpu_custom_call.1} parent=1 // loop_pre_header
      _
    $region3: #{tpu_custom_call.1} parent=1 // loop_header
      %s15 = sphi 0, %s19
      %p16 = scmp.ge.s32.totalorder %s15, 6
      %s22 = sphi 0, %s34
      %s23 = sphi 0, %s30
      %s24 = sphi 0, %s22
      %s25 = sphi 0, %s23
      %s26 = sphi 0, %s24
      %s27 = sphi 0, %s25
      %s37 = sphi 0, %s39
      %s40 = sphi 0, %s37
      %s41 = sphi 0, %s40
      %s57 = sphi 0, %s41
      %s61 = sphi 0, %s61
      %s63 = sphi 0, %s61
      %s64 = sphi 0, %s63
      %s78 = sphi 0, %s64
      %s82 = sphi 0, %s82
      %s84 = sphi 0, %s82
      %s85 = sphi 0, %s84
      %s99 = sphi 0, %s85
      %s103 = sphi 0, %s103
      %s105 = sphi 0, %s103
      %s106 = sphi 0, %s105
      %s120 = sphi 0, %s106
      %s124 = sphi 0, %s124
      %s126 = sphi 0, %s124
      %s127 = sphi 0, %s126
      %s141 = sphi 0, %s127
      %s149 = sphi 0, %s151
      %s152 = sphi 0, %s149
      %s153 = sphi 0, %s152
      %s169 = sphi 0, %s153
    $region4: #{tpu_custom_call.1} parent=1 // loop_header_branch
      %18 = sbr.rel (%p16) target = $region8
    $region5: #{tpu_custom_call.1} parent=1 // loop_body
      %s20 = ssub.s32 %s15, 1
      %s21 = ssub.s32 %s15, 2
      %s28 = sadd.s32 1, %s23
      %p29 = scmp.ge.s32.totalorder %s28, 2
      %s30 = scalar_select %p29, 0, %s28
      %s31 = sadd.s32 1, %s22
      %s32 = scalar_select %p29, %s31, %s22
      %p33 = scmp.ge.s32.totalorder %s32, 2
      %s34 = scalar_select %p33, 0, %s32
      %s35 = ssub.s32 %s22, %s34
      %p36 = scmp.eq.s32.totalorder %s35, 0
      %s38 = sadd.s32 %s37, 1
      %s39 = scalar_select %p36, %s37, %s38
      %p42 = pneg %p36
      %p43 = scmp.eq.s32.totalorder %s15, 3
      %p44 = por %p42, %p43
      %p45 = scmp.ne.s32.totalorder %s37, %s40
      %p46 = scmp.eq.s32.totalorder %s15, 0
      %p47 = por %p45, %p46
      %p48 = scmp.ne.s32.totalorder %s37, %s40
      %p49 = scmp.eq.s32.totalorder %s20, 3
      %p50 = por %p48, %p49
      %p51 = scmp.ne.s32.totalorder %s40, %s41
      %p52 = scmp.eq.s32.totalorder %s20, 0
      %p53 = por %p51, %p52
      %p54 = scmp.ne.s32.totalorder %s40, %s41
      %p55 = scmp.eq.s32.totalorder %s21, 3
      %p56 = por %p54, %p55
      %p58 = scmp.ne.s32.totalorder %s41, %s57
      %p59 = scmp.eq.s32.totalorder %s21, 0
      %p60 = por %p58, %p59
      %s62 = sadd.s32 %s61, 1
      %p65 = scmp.eq.s32.totalorder %s15, 3
      %p66 = scmp.ne.s32.totalorder %s61, %s63
      %p67 = scmp.eq.s32.totalorder %s15, 0
      %p68 = por %p66, %p67
      %p69 = scmp.ne.s32.totalorder %s61, %s63
      %p70 = scmp.eq.s32.totalorder %s20, 3
      %p71 = por %p69, %p70
      %p72 = scmp.ne.s32.totalorder %s63, %s64
      %p73 = scmp.eq.s32.totalorder %s20, 0
      %p74 = por %p72, %p73
      %p75 = scmp.ne.s32.totalorder %s63, %s64
      %p76 = scmp.eq.s32.totalorder %s21, 3
      %p77 = por %p75, %p76
      %p79 = scmp.ne.s32.totalorder %s64, %s78
      %p80 = scmp.eq.s32.totalorder %s21, 0
      %p81 = por %p79, %p80
      %s83 = sadd.s32 %s82, 1
      %p86 = scmp.eq.s32.totalorder %s15, 3
      %p87 = scmp.ne.s32.totalorder %s82, %s84
      %p88 = scmp.eq.s32.totalorder %s15, 0
      %p89 = por %p87, %p88
      %p90 = scmp.ne.s32.totalorder %s82, %s84
      %p91 = scmp.eq.s32.totalorder %s20, 3
      %p92 = por %p90, %p91
      %p93 = scmp.ne.s32.totalorder %s84, %s85
      %p94 = scmp.eq.s32.totalorder %s20, 0
      %p95 = por %p93, %p94
      %p96 = scmp.ne.s32.totalorder %s84, %s85
      %p97 = scmp.eq.s32.totalorder %s21, 3
      %p98 = por %p96, %p97
      %p100 = scmp.ne.s32.totalorder %s85, %s99
      %p101 = scmp.eq.s32.totalorder %s21, 0
      %p102 = por %p100, %p101
      %s104 = sadd.s32 %s103, 1
      %p107 = scmp.eq.s32.totalorder %s15, 3
      %p108 = scmp.ne.s32.totalorder %s103, %s105
      %p109 = scmp.eq.s32.totalorder %s15, 0
      %p110 = por %p108, %p109
      %p111 = scmp.ne.s32.totalorder %s103, %s105
      %p112 = scmp.eq.s32.totalorder %s20, 3
      %p113 = por %p111, %p112
      %p114 = scmp.ne.s32.totalorder %s105, %s106
      %p115 = scmp.eq.s32.totalorder %s20, 0
      %p116 = por %p114, %p115
      %p117 = scmp.ne.s32.totalorder %s105, %s106
      %p118 = scmp.eq.s32.totalorder %s21, 3
      %p119 = por %p117, %p118
      %p121 = scmp.ne.s32.totalorder %s106, %s120
      %p122 = scmp.eq.s32.totalorder %s21, 0
      %p123 = por %p121, %p122
      %s125 = sadd.s32 %s124, 1
      %p128 = scmp.eq.s32.totalorder %s15, 3
      %p129 = scmp.ne.s32.totalorder %s124, %s126
      %p130 = scmp.eq.s32.totalorder %s15, 0
      %p131 = por %p129, %p130
      %p132 = scmp.ne.s32.totalorder %s124, %s126
      %p133 = scmp.eq.s32.totalorder %s20, 3
      %p134 = por %p132, %p133
      %p135 = scmp.ne.s32.totalorder %s126, %s127
      %p136 = scmp.eq.s32.totalorder %s20, 0
      %p137 = por %p135, %p136
      %p138 = scmp.ne.s32.totalorder %s126, %s127
      %p139 = scmp.eq.s32.totalorder %s21, 3
      %p140 = por %p138, %p139
      %p142 = scmp.ne.s32.totalorder %s127, %s141
      %p143 = scmp.eq.s32.totalorder %s21, 0
      %p144 = por %p142, %p143
      %s145 = ssub.s32 %s22, %s34
      %s146 = ssub.s32 %s23, %s30
      %s147 = sor.u32 %s145, %s146
      %p148 = scmp.eq.s32.totalorder %s147, 0
      %s150 = sadd.s32 %s149, 1
      %s151 = scalar_select %p148, %s149, %s150
      %p154 = pneg %p148
      %p155 = scmp.eq.s32.totalorder %s15, 3
      %p156 = por %p154, %p155
      %p157 = scmp.ne.s32.totalorder %s149, %s152
      %p158 = scmp.eq.s32.totalorder %s15, 0
      %p159 = por %p157, %p158
      %p160 = scmp.ne.s32.totalorder %s149, %s152
      %p161 = scmp.eq.s32.totalorder %s20, 3
      %p162 = por %p160, %p161
      %p163 = scmp.ne.s32.totalorder %s152, %s153
      %p164 = scmp.eq.s32.totalorder %s20, 0
      %p165 = por %p163, %p164
      %p166 = scmp.ne.s32.totalorder %s152, %s153
      %p167 = scmp.eq.s32.totalorder %s21, 3
      %p168 = por %p166, %p167
      %p170 = scmp.ne.s32.totalorder %s153, %s169
      %p171 = scmp.eq.s32.totalorder %s21, 0
      %p172 = por %p170, %p171
      %p173 = scmp.le.s32.totalorder 1, %s15
      %p174 = scmp.lt.s32.totalorder %s15, 5
      %p175 = pnand %p173, %p174
      %p176 = pneg %p175
      // Predicated region
      $region9: #{tpu_custom_call.1} parent=5 // pred_check
        _
      $region10: #{tpu_custom_call.1} parent=5 // pred_check_branch
        %178 = sbr.rel (%p175) target = $region12
      $region11: #{tpu_custom_call.1} parent=5 // pred_region
        %s179 = ssub.s32 %s15, 1
        // Predicated region
        $region13: #{tpu_custom_call.1} parent=11 // pred_check
          %p180 = pneg %p74
        $region14: #{tpu_custom_call.1} parent=11 // pred_check_branch
          %182 = sbr.rel (%p180) target = $region16
        $region15: #{tpu_custom_call.1} parent=11 // pred_region
          _
        $region16: #{tpu_custom_call.1} parent=11 // pred_fallthru
          _
        // Predicated region
        $region17: #{tpu_custom_call.1} parent=11 // pred_check
          %p183 = pneg %p95
        $region18: #{tpu_custom_call.1} parent=11 // pred_check_branch
          %185 = sbr.rel (%p183) target = $region20
        $region19: #{tpu_custom_call.1} parent=11 // pred_region
          _
        $region20: #{tpu_custom_call.1} parent=11 // pred_fallthru
          _
        // Predicated region
        $region21: #{tpu_custom_call.1} parent=11 // pred_check
          %p186 = pneg %p116
        $region22: #{tpu_custom_call.1} parent=11 // pred_check_branch
          %188 = sbr.rel (%p186) target = $region24
        $region23: #{tpu_custom_call.1} parent=11 // pred_region
          %190 = vsyncadd [#allocation3], 0
          %s191 = sshll.u32 %s3, 4
          %s192 = int_to_ptr.hbm [resolvable:$true] %s191
          %s193 = sshll.u32 [#allocation2], 4
          %s194 = int_to_ptr.vmem [resolvable:$true] %s193
          %199 = dma.hbm_to_vmem [thread:$0]  %s192, 6912, %s194, [#allocation3], 128, 128, 8
        $region24: #{tpu_custom_call.1} parent=11 // pred_fallthru
          _
        // Predicated region
        $region25: #{tpu_custom_call.1} parent=11 // pred_check
          %p200 = pneg %p137
        $region26: #{tpu_custom_call.1} parent=11 // pred_check_branch
          %202 = sbr.rel (%p200) target = $region28
        $region27: #{tpu_custom_call.1} parent=11 // pred_region
          _
        $region28: #{tpu_custom_call.1} parent=11 // pred_fallthru
          _
      $region12: #{tpu_custom_call.1} parent=5 // pred_fallthru
        _
      %p203 = scmp.lt.s32.totalorder %s15, 4
      // Predicated region
      $region29: #{tpu_custom_call.1} parent=5 // pred_check
        %p204 = pneg %p203
      $region30: #{tpu_custom_call.1} parent=5 // pred_check_branch
        %206 = sbr.rel (%p204) target = $region32
      $region31: #{tpu_custom_call.1} parent=5 // pred_region
        // Predicated region
        $region33: #{tpu_custom_call.1} parent=31 // pred_check
          %p207 = pneg %p47
        $region34: #{tpu_custom_call.1} parent=31 // pred_check_branch
          %209 = sbr.rel (%p207) target = $region36
        $region35: #{tpu_custom_call.1} parent=31 // pred_region
          %p210 = scmp.lt.s32.totalorder %s22, 1
          %s211 = scalar_select %p210, %s22, 1
          %s212 = smul.addr %s211, 6
          %s213 = smul.addr %s212, 4
          %s214 = scalar_lea.vmem %s0, %s213
        $region36: #{tpu_custom_call.1} parent=31 // pred_fallthru
          _
      $region32: #{tpu_custom_call.1} parent=5 // pred_fallthru
        _
      %p215 = scmp.le.s32.totalorder 1, %s15
      %p216 = scmp.lt.s32.totalorder %s15, 5
      %p217 = pnand %p215, %p216
      %p218 = pneg %p217
      // Predicated region
      $region37: #{tpu_custom_call.1} parent=5 // pred_check
        _
      $region38: #{tpu_custom_call.1} parent=5 // pred_check_branch
        %220 = sbr.rel (%p217) target = $region40
      $region39: #{tpu_custom_call.1} parent=5 // pred_region
        %s221 = ssub.s32 %s15, 1
        // Predicated region
        $region41: #{tpu_custom_call.1} parent=39 // pred_check
          %p222 = pneg %p116
        $region42: #{tpu_custom_call.1} parent=39 // pred_check_branch
          %224 = sbr.rel (%p222) target = $region44
        $region43: #{tpu_custom_call.1} parent=39 // pred_region
          %226 = dma.done [#allocation3], 6912
        $region44: #{tpu_custom_call.1} parent=39 // pred_fallthru
          _
        %p227 = scmp.lt.s32.totalorder %s24, 1
        %s228 = scalar_select %p227, %s24, 1
        %s229 = smul.addr %s228, 6
        %s230 = smul.addr %s229, 4
        %s231 = scalar_lea.vmem %s0, %s230
        %p232 = pneg %p53
        %p233 = pneg %p50
        %p234 = pneg %p74
        %p235 = pneg %p71
        %p236 = pneg %p95
        %p237 = pneg %p92
        %p238 = pneg %p116
        %p239 = pneg %p113
        %p240 = pneg %p137
        %p241 = pneg %p134
        %p242 = pneg %p165
        %p243 = pneg %p162
        %s244 = sand.u32 %s152, 1
        %s245 = scalar_lea.sflag [#allocation4], %s244
        %s246 = sand.u32 %s152, 1
        %s247 = smul.addr %s246, 16
        %s248 = scalar_lea.vmem [#allocation5], %s247
        %p249 = scmp.lt.s32.totalorder %s24, 1
        %s250 = scalar_select %p249, %s24, 1
        %s251 = smul.addr %s250, 6
        %s252 = smul.addr %s251, 4
        %s253 = scalar_lea.vmem %s0, %s252
        %s255 = smul.u32 %s25, 8
        %s256 = sshra.s32 %s255, 3
        %s257 = sand.u32 %s255, 7
        %s258 = smul.u32 %s256, 2
        %s259 = smul.addr %s258, 4
        %s260 = scalar_lea.vmem %s253, %s259
        %v261 = vld [vmem:[%s260] sm:$0xff]
        %v262 = vld [vmem:[%s260 + $0x8] sm:$0x11]
        %v263 = vld [vmem:[%s1] sm:$0xff]
        %v264 = vld [vmem:[%s1 + $0x8] sm:$0xff]
        %v265 = vld [vmem:[%s1 + $0x10] sm:$0xff]
        %v266 = vld [vmem:[%s1 + $0x18] sm:$0xff]
        %v267 = vld [vmem:[%s1 + $0x20] sm:$0xff]
        %v268 = vld [vmem:[%s1 + $0x28] sm:$0xff]
        %v269 = vld [vmem:[%s1 + $0x30] sm:$0xff]
        %v270 = vld [vmem:[%s1 + $0x38] sm:$0xff]
        %v271 = vld [vmem:[%s1 + $0x40] sm:$0xff]
        %v272 = vld [vmem:[%s1 + $0x48] sm:$0xff]
        %v273 = vld [vmem:[%s1 + $0x50] sm:$0xff]
        %v274 = vld [vmem:[%s1 + $0x58] sm:$0xff]
        %v275 = vld [vmem:[%s1 + $0x60] sm:$0xff]
        %v276 = vld [vmem:[%s1 + $0x68] sm:$0xff]
        %v277 = vld [vmem:[%s1 + $0x70] sm:$0xff]
        %v278 = vld [vmem:[%s1 + $0x78] sm:$0xff]
        %v279 = vld [vmem:[%s1 + $0x80] sm:$0xff]
        %v280 = vld [vmem:[%s1 + $0x88] sm:$0xff]
        %v281 = vld [vmem:[%s1 + $0x90] sm:$0xff]
        %v282 = vld [vmem:[%s1 + $0x98] sm:$0xff]
        %v283 = vld [vmem:[%s1 + $0xa0] sm:$0xff]
        %v284 = vld [vmem:[%s1 + $0xa8] sm:$0xff]
        %v285 = vld [vmem:[%s1 + $0xb0] sm:$0xff]
        %v286 = vld [vmem:[%s1 + $0xb8] sm:$0xff]
        %v287 = vld [vmem:[%s2] sm:$0x3]
        %v289 = vperm.slane %v287, 0
        %v290 = vperm.slane %v287, 1
        %v295 = vunpack.c.l.b16 %v261
        %v296 = vunpack.c.h.b16 %v261
        %v297 = vunpack.c.l.b16 %v262
        %v298 = vunpack.c.h.b16 %v262
        %v299 = vpack.c.b16 %v297, %v295
        %v300 = vpack.c.b16 %v298, %v296
        %v326 = vunpack.c.l.b16 %v263
        %v327 = vunpack.c.h.b16 %v263
        %v328 = vunpack.c.l.b16 %v264
        %v329 = vunpack.c.h.b16 %v264
        %v330 = vunpack.c.l.b16 %v265
        %v331 = vunpack.c.h.b16 %v265
        %v332 = vunpack.c.l.b16 %v266
        %v333 = vunpack.c.h.b16 %v266
        %v334 = vunpack.c.l.b16 %v267
        %v335 = vunpack.c.h.b16 %v267
        %v336 = vunpack.c.l.b16 %v268
        %v337 = vunpack.c.h.b16 %v268
        %v338 = vunpack.c.l.b16 %v269
        %v339 = vunpack.c.h.b16 %v269
        %v340 = vunpack.c.l.b16 %v270
        %v341 = vunpack.c.h.b16 %v270
        %v342 = vunpack.c.l.b16 %v271
        %v343 = vunpack.c.h.b16 %v271
        %v344 = vunpack.c.l.b16 %v272
        %v345 = vunpack.c.h.b16 %v272
        %v346 = vunpack.c.l.b16 %v273
        %v347 = vunpack.c.h.b16 %v273
        %v348 = vunpack.c.l.b16 %v274
        %v349 = vunpack.c.h.b16 %v274
        %v350 = vunpack.c.l.b16 %v275
        %v351 = vunpack.c.h.b16 %v275
        %v352 = vunpack.c.l.b16 %v276
        %v353 = vunpack.c.h.b16 %v276
        %v354 = vunpack.c.l.b16 %v277
        %v355 = vunpack.c.h.b16 %v277
        %v356 = vunpack.c.l.b16 %v278
        %v357 = vunpack.c.h.b16 %v278
        %v358 = vunpack.c.l.b16 %v279
        %v359 = vunpack.c.h.b16 %v279
        %v360 = vunpack.c.l.b16 %v280
        %v361 = vunpack.c.h.b16 %v280
        %v362 = vunpack.c.l.b16 %v281
        %v363 = vunpack.c.h.b16 %v281
        %v364 = vunpack.c.l.b16 %v282
        %v365 = vunpack.c.h.b16 %v282
        %v366 = vunpack.c.l.b16 %v283
        %v367 = vunpack.c.h.b16 %v283
        %v368 = vunpack.c.l.b16 %v284
        %v369 = vunpack.c.h.b16 %v284
        %v370 = vunpack.c.l.b16 %v285
        %v371 = vunpack.c.h.b16 %v285
        %v372 = vunpack.c.l.b16 %v286
        %v373 = vunpack.c.h.b16 %v286
        %v374 = vpack.c.b16 %v328, %v326
        %v375 = vpack.c.b16 %v329, %v327
        %v376 = vpack.c.b16 %v332, %v330
        %v377 = vpack.c.b16 %v333, %v331
        %v378 = vpack.c.b16 %v336, %v334
        %v379 = vpack.c.b16 %v337, %v335
        %v380 = vpack.c.b16 %v340, %v338
        %v381 = vpack.c.b16 %v341, %v339
        %v382 = vpack.c.b16 %v344, %v342
        %v383 = vpack.c.b16 %v345, %v343
        %v384 = vpack.c.b16 %v348, %v346
        %v385 = vpack.c.b16 %v349, %v347
        %v386 = vpack.c.b16 %v352, %v350
        %v387 = vpack.c.b16 %v353, %v351
        %v388 = vpack.c.b16 %v356, %v354
        %v389 = vpack.c.b16 %v357, %v355
        %v390 = vpack.c.b16 %v360, %v358
        %v391 = vpack.c.b16 %v361, %v359
        %v392 = vpack.c.b16 %v364, %v362
        %v393 = vpack.c.b16 %v365, %v363
        %v394 = vpack.c.b16 %v368, %v366
        %v395 = vpack.c.b16 %v369, %v367
        %v396 = vpack.c.b16 %v372, %v370
        %v397 = vpack.c.b16 %v373, %v371
        %vm422 = vcmask 523264
        %v424 = vsel %vm422, %v300, 0
        %426 = vmatpush.bf16.msra.mxu0 %v388
        %427 = vmatpush.bf16.msra.mxu0 %v386
        %428 = vmatpush.bf16.msra.mxu0 %v384
        %429 = vmatpush.bf16.msra.mxu0 %v382
        %430 = vmatpush.bf16.msra.mxu0 %v380
        %431 = vmatpush.bf16.msra.mxu0 %v378
        %432 = vmatpush.bf16.msra.mxu0 %v376
        %433 = vmatpush.bf16.msra.mxu0 %v374
        %434 = vmatmul.bf16.gmra.mxu0 %v299
        %v435 = vpop.f32.mrf.mxu0
        %v436 = vadd.f32 %v289, %v435
        %v437 = vpop.f32.mrf.mxu0
        %v438 = vadd.f32 %v289, %v437
        %439 = vdwg.mxu0
        %440 = vmatpush.bf16.msra.mxu0 0
        %441 = vmatpush.bf16.msra.mxu0 0
        %442 = vmatpush.bf16.msra.mxu0 0
        %443 = vmatpush.bf16.msra.mxu0 0
        %444 = vmatpush.bf16.msra.mxu0 %v396
        %445 = vmatpush.bf16.msra.mxu0 %v394
        %446 = vmatpush.bf16.msra.mxu0 %v392
        %447 = vmatpush.bf16.msra.mxu0 %v390
        %448 = vmatmul.bf16.gmra.mxu0 %v424
        %v449 = vpop.f32.mrf.mxu0
        %v450 = vadd.f32 %v436, %v449
        %v451 = vpop.f32.mrf.mxu0
        %v452 = vadd.f32 %v438, %v451
        %453 = vdwg.mxu0
        %454 = vmatpush.bf16.msra.mxu0 %v389
        %455 = vmatpush.bf16.msra.mxu0 %v387
        %456 = vmatpush.bf16.msra.mxu0 %v385
        %457 = vmatpush.bf16.msra.mxu0 %v383
        %458 = vmatpush.bf16.msra.mxu0 %v381
        %459 = vmatpush.bf16.msra.mxu0 %v379
        %460 = vmatpush.bf16.msra.mxu0 %v377
        %461 = vmatpush.bf16.msra.mxu0 %v375
        %462 = vmatmul.bf16.gmra.mxu0 %v299
        %v463 = vpop.f32.mrf.mxu0
        %v464 = vadd.f32 %v290, %v463
        %v465 = vpop.f32.mrf.mxu0
        %v466 = vadd.f32 %v290, %v465
        %467 = vdwg.mxu0
        %468 = vmatpush.bf16.msra.mxu0 0
        %469 = vmatpush.bf16.msra.mxu0 0
        %470 = vmatpush.bf16.msra.mxu0 0
        %471 = vmatpush.bf16.msra.mxu0 0
        %472 = vmatpush.bf16.msra.mxu0 %v397
        %473 = vmatpush.bf16.msra.mxu0 %v395
        %474 = vmatpush.bf16.msra.mxu0 %v393
        %475 = vmatpush.bf16.msra.mxu0 %v391
        %476 = vmatmul.bf16.gmra.mxu0 %v424
        %v477 = vpop.f32.mrf.mxu0
        %v478 = vadd.f32 %v464, %v477
        %v479 = vpop.f32.mrf.mxu0
        %v480 = vadd.f32 %v466, %v479
        %481 = vdwg.mxu0
        %v482 = vmax.f32 %v450, 0.0
        %v483 = vmax.f32 %v478, 0.0
        %v484 = vmax.f32 %v452, 0.0
        %v485 = vmax.f32 %v480, 0.0
        %v486 = vlaneseq
        %v487 = vshrl.u32 %v486, 7
        %v488 = vadd.s32 %v487, 8
        %v489 = vstv %s255
        %v490 = vadd.s32 %v487, %v489
        %v491 = vadd.s32 %v488, %v489
        %vm492 = vcmp.ge.s32.totalorder %v490, 1
        %vm493 = vcmp.ge.s32.totalorder %v491, 1
        %vm494 = vcmp.le.s32.totalorder %v490, 16
        %vm495 = vcmp.le.s32.totalorder %v491, 16
        %vm496 = vmand %vm492, %vm494
        %vm497 = vmand %vm493, %vm495
        %v498 = vsel %vm496, 1, 0
        %v499 = vsel %vm497, 1, 0
        %vm500 = vcmp.eq.s32.totalorder %v498, 1
        %vm501 = vcmp.eq.s32.totalorder %v499, 1
        %v502 = vsel %vm500, %v482, 0.0
        %v503 = vsel %vm500, %v483, 0.0
        %v504 = vsel %vm501, %v484, 0.0
        %v505 = vsel %vm501, %v485, 0.0
        %v506 = vpack.c.bf16 %v502, %v502
        %v507 = vpack.c.bf16 %v503, %v503
        %v508 = vld [vmem:[#allocation2] sm:$0xff]
        %v509 = vld [vmem:[#allocation2 + $0x8] sm:$0xff]
        %v510 = vld [vmem:[#allocation2 + $0x10] sm:$0xff]
        %v511 = vld [vmem:[#allocation2 + $0x18] sm:$0xff]
        %v512 = vld [vmem:[#allocation2 + $0x20] sm:$0xff]
        %v513 = vld [vmem:[#allocation2 + $0x28] sm:$0xff]
        %v514 = vld [vmem:[#allocation2 + $0x30] sm:$0xff]
        %v515 = vld [vmem:[#allocation2 + $0x38] sm:$0xff]
        %v516 = vld [vmem:[#allocation2 + $0x40] sm:$0xff]
        %v517 = vld [vmem:[#allocation2 + $0x48] sm:$0xff]
        %v518 = vld [vmem:[#allocation2 + $0x50] sm:$0xff]
        %v519 = vld [vmem:[#allocation2 + $0x58] sm:$0xff]
        %v520 = vld [vmem:[#allocation2 + $0x60] sm:$0xff]
        %v521 = vld [vmem:[#allocation2 + $0x68] sm:$0xff]
        %v522 = vld [vmem:[#allocation2 + $0x70] sm:$0xff]
        %v523 = vld [vmem:[#allocation2 + $0x78] sm:$0xff]
        %v524 = vld [vmem:[#allocation2 + $0x80] sm:$0xff]
        %v525 = vld [vmem:[#allocation2 + $0x88] sm:$0xff]
        %v526 = vpack.c.bf16 %v504, %v502
        %v527 = vpack.c.bf16 %v505, %v503
        %s528 = scalar_lea.vmem [#allocation2], 144
        %v529 = vld [vmem:[%s528] sm:$0xff]
        %v530 = vld [vmem:[%s528 + $0x8] sm:$0xff]
        %v531 = vld [vmem:[%s528 + $0x10] sm:$0xff]
        %v532 = vld [vmem:[%s528 + $0x18] sm:$0xff]
        %v533 = vld [vmem:[%s528 + $0x20] sm:$0xff]
        %v534 = vld [vmem:[%s528 + $0x28] sm:$0xff]
        %v535 = vld [vmem:[%s528 + $0x30] sm:$0xff]
        %v536 = vld [vmem:[%s528 + $0x38] sm:$0xff]
        %v537 = vld [vmem:[%s528 + $0x40] sm:$0xff]
        %v538 = vld [vmem:[%s528 + $0x48] sm:$0xff]
        %v539 = vld [vmem:[%s528 + $0x50] sm:$0xff]
        %v540 = vld [vmem:[%s528 + $0x58] sm:$0xff]
        %v541 = vld [vmem:[%s528 + $0x60] sm:$0xff]
        %v542 = vld [vmem:[%s528 + $0x68] sm:$0xff]
        %v543 = vld [vmem:[%s528 + $0x70] sm:$0xff]
        %v544 = vld [vmem:[%s528 + $0x78] sm:$0xff]
        %v545 = vld [vmem:[%s528 + $0x80] sm:$0xff]
        %v546 = vld [vmem:[%s528 + $0x88] sm:$0xff]
        %v548 = vshrl.u32 %v526, 16
        %v550 = vshll.u32 %v526, 16
        %v552 = vrot.slane %v550, 1
        %v553 = vor.u32 %v548, %v552
        %v555 = vshrl.u32 %v527, 16
        %v557 = vshll.u32 %v527, 16
        %v559 = vrot.slane %v557, 1
        %v560 = vor.u32 %v555, %v559
        %v580 = vunpack.c.l.b16 %v529
        %v581 = vunpack.c.h.b16 %v529
        %v582 = vunpack.c.l.b16 %v530
        %v583 = vunpack.c.h.b16 %v530
        %v584 = vunpack.c.l.b16 %v531
        %v585 = vunpack.c.h.b16 %v531
        %v586 = vunpack.c.l.b16 %v532
        %v587 = vunpack.c.h.b16 %v532
        %v588 = vunpack.c.l.b16 %v533
        %v589 = vunpack.c.h.b16 %v533
        %v590 = vunpack.c.l.b16 %v534
        %v591 = vunpack.c.h.b16 %v534
        %v592 = vunpack.c.l.b16 %v535
        %v593 = vunpack.c.h.b16 %v535
        %v594 = vunpack.c.l.b16 %v536
        %v595 = vunpack.c.h.b16 %v536
        %v596 = vunpack.c.l.b16 %v537
        %v597 = vunpack.c.h.b16 %v537
        %v598 = vunpack.c.l.b16 %v538
        %v599 = vunpack.c.h.b16 %v538
        %v600 = vunpack.c.l.b16 %v539
        %v601 = vunpack.c.h.b16 %v539
        %v602 = vunpack.c.l.b16 %v540
        %v603 = vunpack.c.h.b16 %v540
        %v604 = vunpack.c.l.b16 %v541
        %v605 = vunpack.c.h.b16 %v541
        %v606 = vunpack.c.l.b16 %v542
        %v607 = vunpack.c.h.b16 %v542
        %v608 = vunpack.c.l.b16 %v543
        %v609 = vunpack.c.h.b16 %v543
        %v610 = vunpack.c.l.b16 %v544
        %v611 = vunpack.c.h.b16 %v544
        %v612 = vunpack.c.l.b16 %v545
        %v613 = vunpack.c.h.b16 %v545
        %v614 = vunpack.c.l.b16 %v546
        %v615 = vunpack.c.h.b16 %v546
        %v616 = vpack.c.b16 %v582, %v580
        %v617 = vpack.c.b16 %v583, %v581
        %v618 = vpack.c.b16 %v586, %v584
        %v619 = vpack.c.b16 %v587, %v585
        %v620 = vpack.c.b16 %v590, %v588
        %v621 = vpack.c.b16 %v591, %v589
        %v622 = vpack.c.b16 %v594, %v592
        %v623 = vpack.c.b16 %v595, %v593
        %v624 = vpack.c.b16 %v598, %v596
        %v625 = vpack.c.b16 %v599, %v597
        %v626 = vpack.c.b16 %v602, %v600
        %v627 = vpack.c.b16 %v603, %v601
        %v628 = vpack.c.b16 %v606, %v604
        %v629 = vpack.c.b16 %v607, %v605
        %v630 = vpack.c.b16 %v610, %v608
        %v631 = vpack.c.b16 %v611, %v609
        %v632 = vpack.c.b16 %v614, %v612
        %v633 = vpack.c.b16 %v615, %v613
        %vm652 = vcmask 130048
        %v654 = vsel %vm652, %v560, 0
        %656 = vmatpush.bf16.msra.mxu0 %v630
        %657 = vmatpush.bf16.msra.mxu0 %v628
        %658 = vmatpush.bf16.msra.mxu0 %v626
        %659 = vmatpush.bf16.msra.mxu0 %v624
        %660 = vmatpush.bf16.msra.mxu0 %v622
        %661 = vmatpush.bf16.msra.mxu0 %v620
        %662 = vmatpush.bf16.msra.mxu0 %v618
        %663 = vmatpush.bf16.msra.mxu0 %v616
        %664 = vmatmul.bf16.gmra.mxu0 %v553
        %v665 = vpop.f32.mrf.mxu0
        %v666 = vadd.f32 0.0, %v665
        %v667 = vpop.f32.mrf.mxu0
        %668 = vdwg.mxu0
        %669 = vmatpush.bf16.msra.mxu0 0
        %670 = vmatpush.bf16.msra.mxu0 0
        %671 = vmatpush.bf16.msra.mxu0 0
        %672 = vmatpush.bf16.msra.mxu0 0
        %673 = vmatpush.bf16.msra.mxu0 0
        %674 = vmatpush.bf16.msra.mxu0 0
        %675 = vmatpush.bf16.msra.mxu0 0
        %676 = vmatpush.bf16.msra.mxu0 %v632
        %677 = vmatmul.bf16.gmra.mxu0 %v654
        %v678 = vpop.f32.mrf.mxu0
        %v679 = vadd.f32 %v666, %v678
        %v680 = vpop.f32.mrf.mxu0
        %681 = vdwg.mxu0
        %682 = vmatpush.bf16.msra.mxu0 %v631
        %683 = vmatpush.bf16.msra.mxu0 %v629
        %684 = vmatpush.bf16.msra.mxu0 %v627
        %685 = vmatpush.bf16.msra.mxu0 %v625
        %686 = vmatpush.bf16.msra.mxu0 %v623
        %687 = vmatpush.bf16.msra.mxu0 %v621
        %688 = vmatpush.bf16.msra.mxu0 %v619
        %689 = vmatpush.bf16.msra.mxu0 %v617
        %690 = vmatmul.bf16.gmra.mxu0 %v553
        %v691 = vpop.f32.mrf.mxu0
        %v692 = vadd.f32 0.0, %v691
        %v693 = vpop.f32.mrf.mxu0
        %694 = vdwg.mxu0
        %695 = vmatpush.bf16.msra.mxu0 0
        %696 = vmatpush.bf16.msra.mxu0 0
        %697 = vmatpush.bf16.msra.mxu0 0
        %698 = vmatpush.bf16.msra.mxu0 0
        %699 = vmatpush.bf16.msra.mxu0 0
        %700 = vmatpush.bf16.msra.mxu0 0
        %701 = vmatpush.bf16.msra.mxu0 0
        %702 = vmatpush.bf16.msra.mxu0 %v633
        %703 = vmatmul.bf16.gmra.mxu0 %v654
        %v704 = vpop.f32.mrf.mxu0
        %v705 = vadd.f32 %v692, %v704
        %v706 = vpop.f32.mrf.mxu0
        %707 = vdwg.mxu0
        %v726 = vunpack.c.l.b16 %v508
        %v727 = vunpack.c.h.b16 %v508
        %v728 = vunpack.c.l.b16 %v509
        %v729 = vunpack.c.h.b16 %v509
        %v730 = vunpack.c.l.b16 %v510
        %v731 = vunpack.c.h.b16 %v510
        %v732 = vunpack.c.l.b16 %v511
        %v733 = vunpack.c.h.b16 %v511
        %v734 = vunpack.c.l.b16 %v512
        %v735 = vunpack.c.h.b16 %v512
        %v736 = vunpack.c.l.b16 %v513
        %v737 = vunpack.c.h.b16 %v513
        %v738 = vunpack.c.l.b16 %v514
        %v739 = vunpack.c.h.b16 %v514
        %v740 = vunpack.c.l.b16 %v515
        %v741 = vunpack.c.h.b16 %v515
        %v742 = vunpack.c.l.b16 %v516
        %v743 = vunpack.c.h.b16 %v516
        %v744 = vunpack.c.l.b16 %v517
        %v745 = vunpack.c.h.b16 %v517
        %v746 = vunpack.c.l.b16 %v518
        %v747 = vunpack.c.h.b16 %v518
        %v748 = vunpack.c.l.b16 %v519
        %v749 = vunpack.c.h.b16 %v519
        %v750 = vunpack.c.l.b16 %v520
        %v751 = vunpack.c.h.b16 %v520
        %v752 = vunpack.c.l.b16 %v521
        %v753 = vunpack.c.h.b16 %v521
        %v754 = vunpack.c.l.b16 %v522
        %v755 = vunpack.c.h.b16 %v522
        %v756 = vunpack.c.l.b16 %v523
        %v757 = vunpack.c.h.b16 %v523
        %v758 = vunpack.c.l.b16 %v524
        %v759 = vunpack.c.h.b16 %v524
        %v760 = vunpack.c.l.b16 %v525
        %v761 = vunpack.c.h.b16 %v525
        %v762 = vpack.c.b16 %v728, %v726
        %v763 = vpack.c.b16 %v729, %v727
        %v764 = vpack.c.b16 %v732, %v730
        %v765 = vpack.c.b16 %v733, %v731
        %v766 = vpack.c.b16 %v736, %v734
        %v767 = vpack.c.b16 %v737, %v735
        %v768 = vpack.c.b16 %v740, %v738
        %v769 = vpack.c.b16 %v741, %v739
        %v770 = vpack.c.b16 %v744, %v742
        %v771 = vpack.c.b16 %v745, %v743
        %v772 = vpack.c.b16 %v748, %v746
        %v773 = vpack.c.b16 %v749, %v747
        %v774 = vpack.c.b16 %v752, %v750
        %v775 = vpack.c.b16 %v753, %v751
        %v776 = vpack.c.b16 %v756, %v754
        %v777 = vpack.c.b16 %v757, %v755
        %v778 = vpack.c.b16 %v760, %v758
        %v779 = vpack.c.b16 %v761, %v759
        %v799 = vsel %vm652, %v507, 0
        %801 = vmatpush.bf16.msra.mxu0 %v776
        %802 = vmatpush.bf16.msra.mxu0 %v774
        %803 = vmatpush.bf16.msra.mxu0 %v772
        %804 = vmatpush.bf16.msra.mxu0 %v770
        %805 = vmatpush.bf16.msra.mxu0 %v768
        %806 = vmatpush.bf16.msra.mxu0 %v766
        %807 = vmatpush.bf16.msra.mxu0 %v764
        %808 = vmatpush.bf16.msra.mxu0 %v762
        %809 = vmatmul.bf16.gmra.mxu0 %v506
        %v810 = vpop.f32.mrf.mxu0
        %v811 = vadd.f32 %v679, %v810
        %v812 = vpop.f32.mrf.mxu0
        %813 = vdwg.mxu0
        %814 = vmatpush.bf16.msra.mxu0 0
        %815 = vmatpush.bf16.msra.mxu0 0
        %816 = vmatpush.bf16.msra.mxu0 0
        %817 = vmatpush.bf16.msra.mxu0 0
        %818 = vmatpush.bf16.msra.mxu0 0
        %819 = vmatpush.bf16.msra.mxu0 0
        %820 = vmatpush.bf16.msra.mxu0 0
        %821 = vmatpush.bf16.msra.mxu0 %v778
        %822 = vmatmul.bf16.gmra.mxu0 %v799
        %v823 = vpop.f32.mrf.mxu0
        %v824 = vadd.f32 %v811, %v823
        %v825 = vpop.f32.mrf.mxu0
        %826 = vdwg.mxu0
        %827 = vmatpush.bf16.msra.mxu0 %v777
        %828 = vmatpush.bf16.msra.mxu0 %v775
        %829 = vmatpush.bf16.msra.mxu0 %v773
        %830 = vmatpush.bf16.msra.mxu0 %v771
        %831 = vmatpush.bf16.msra.mxu0 %v769
        %832 = vmatpush.bf16.msra.mxu0 %v767
        %833 = vmatpush.bf16.msra.mxu0 %v765
        %834 = vmatpush.bf16.msra.mxu0 %v763
        %835 = vmatmul.bf16.gmra.mxu0 %v506
        %v836 = vpop.f32.mrf.mxu0
        %v837 = vadd.f32 %v705, %v836
        %v838 = vpop.f32.mrf.mxu0
        %839 = vdwg.mxu0
        %840 = vmatpush.bf16.msra.mxu0 0
        %841 = vmatpush.bf16.msra.mxu0 0
        %842 = vmatpush.bf16.msra.mxu0 0
        %843 = vmatpush.bf16.msra.mxu0 0
        %844 = vmatpush.bf16.msra.mxu0 0
        %845 = vmatpush.bf16.msra.mxu0 0
        %846 = vmatpush.bf16.msra.mxu0 0
        %847 = vmatpush.bf16.msra.mxu0 %v779
        %848 = vmatmul.bf16.gmra.mxu0 %v799
        %v849 = vpop.f32.mrf.mxu0
        %v850 = vadd.f32 %v837, %v849
        %v851 = vpop.f32.mrf.mxu0
        %852 = vdwg.mxu0
        %s853 = scalar_lea.vmem [#allocation2], 288
        %v854 = vld [vmem:[%s853] sm:$0xff]
        %v855 = vld [vmem:[%s853 + $0x8] sm:$0xff]
        %v856 = vld [vmem:[%s853 + $0x10] sm:$0xff]
        %v857 = vld [vmem:[%s853 + $0x18] sm:$0xff]
        %v858 = vld [vmem:[%s853 + $0x20] sm:$0xff]
        %v859 = vld [vmem:[%s853 + $0x28] sm:$0xff]
        %v860 = vld [vmem:[%s853 + $0x30] sm:$0xff]
        %v861 = vld [vmem:[%s853 + $0x38] sm:$0xff]
        %v862 = vld [vmem:[%s853 + $0x40] sm:$0xff]
        %v863 = vld [vmem:[%s853 + $0x48] sm:$0xff]
        %v864 = vld [vmem:[%s853 + $0x50] sm:$0xff]
        %v865 = vld [vmem:[%s853 + $0x58] sm:$0xff]
        %v866 = vld [vmem:[%s853 + $0x60] sm:$0xff]
        %v867 = vld [vmem:[%s853 + $0x68] sm:$0xff]
        %v868 = vld [vmem:[%s853 + $0x70] sm:$0xff]
        %v869 = vld [vmem:[%s853 + $0x78] sm:$0xff]
        %v870 = vld [vmem:[%s853 + $0x80] sm:$0xff]
        %v871 = vld [vmem:[%s853 + $0x88] sm:$0xff]
        %v874 = vrot.slane %v526, 1
        %v875 = vrot.slane %v527, 1
        %v895 = vunpack.c.l.b16 %v854
        %v896 = vunpack.c.h.b16 %v854
        %v897 = vunpack.c.l.b16 %v855
        %v898 = vunpack.c.h.b16 %v855
        %v899 = vunpack.c.l.b16 %v856
        %v900 = vunpack.c.h.b16 %v856
        %v901 = vunpack.c.l.b16 %v857
        %v902 = vunpack.c.h.b16 %v857
        %v903 = vunpack.c.l.b16 %v858
        %v904 = vunpack.c.h.b16 %v858
        %v905 = vunpack.c.l.b16 %v859
        %v906 = vunpack.c.h.b16 %v859
        %v907 = vunpack.c.l.b16 %v860
        %v908 = vunpack.c.h.b16 %v860
        %v909 = vunpack.c.l.b16 %v861
        %v910 = vunpack.c.h.b16 %v861
        %v911 = vunpack.c.l.b16 %v862
        %v912 = vunpack.c.h.b16 %v862
        %v913 = vunpack.c.l.b16 %v863
        %v914 = vunpack.c.h.b16 %v863
        %v915 = vunpack.c.l.b16 %v864
        %v916 = vunpack.c.h.b16 %v864
        %v917 = vunpack.c.l.b16 %v865
        %v918 = vunpack.c.h.b16 %v865
        %v919 = vunpack.c.l.b16 %v866
        %v920 = vunpack.c.h.b16 %v866
        %v921 = vunpack.c.l.b16 %v867
        %v922 = vunpack.c.h.b16 %v867
        %v923 = vunpack.c.l.b16 %v868
        %v924 = vunpack.c.h.b16 %v868
        %v925 = vunpack.c.l.b16 %v869
        %v926 = vunpack.c.h.b16 %v869
        %v927 = vunpack.c.l.b16 %v870
        %v928 = vunpack.c.h.b16 %v870
        %v929 = vunpack.c.l.b16 %v871
        %v930 = vunpack.c.h.b16 %v871
        %v931 = vpack.c.b16 %v897, %v895
        %v932 = vpack.c.b16 %v898, %v896
        %v933 = vpack.c.b16 %v901, %v899
        %v934 = vpack.c.b16 %v902, %v900
        %v935 = vpack.c.b16 %v905, %v903
        %v936 = vpack.c.b16 %v906, %v904
        %v937 = vpack.c.b16 %v909, %v907
        %v938 = vpack.c.b16 %v910, %v908
        %v939 = vpack.c.b16 %v913, %v911
        %v940 = vpack.c.b16 %v914, %v912
        %v941 = vpack.c.b16 %v917, %v915
        %v942 = vpack.c.b16 %v918, %v916
        %v943 = vpack.c.b16 %v921, %v919
        %v944 = vpack.c.b16 %v922, %v920
        %v945 = vpack.c.b16 %v925, %v923
        %v946 = vpack.c.b16 %v926, %v924
        %v947 = vpack.c.b16 %v929, %v927
        %v948 = vpack.c.b16 %v930, %v928
        %v968 = vsel %vm652, %v875, 0
        %970 = vmatpush.bf16.msra.mxu0 %v945
        %971 = vmatpush.bf16.msra.mxu0 %v943
        %972 = vmatpush.bf16.msra.mxu0 %v941
        %973 = vmatpush.bf16.msra.mxu0 %v939
        %974 = vmatpush.bf16.msra.mxu0 %v937
        %975 = vmatpush.bf16.msra.mxu0 %v935
        %976 = vmatpush.bf16.msra.mxu0 %v933
        %977 = vmatpush.bf16.msra.mxu0 %v931
        %978 = vmatmul.bf16.gmra.mxu0 %v874
        %v979 = vpop.f32.mrf.mxu0
        %v980 = vadd.f32 0.0, %v979
        %v981 = vpop.f32.mrf.mxu0
        %982 = vdwg.mxu0
        %983 = vmatpush.bf16.msra.mxu0 0
        %984 = vmatpush.bf16.msra.mxu0 0
        %985 = vmatpush.bf16.msra.mxu0 0
        %986 = vmatpush.bf16.msra.mxu0 0
        %987 = vmatpush.bf16.msra.mxu0 0
        %988 = vmatpush.bf16.msra.mxu0 0
        %989 = vmatpush.bf16.msra.mxu0 0
        %990 = vmatpush.bf16.msra.mxu0 %v947
        %991 = vmatmul.bf16.gmra.mxu0 %v968
        %v992 = vpop.f32.mrf.mxu0
        %v993 = vadd.f32 %v980, %v992
        %v994 = vpop.f32.mrf.mxu0
        %995 = vdwg.mxu0
        %996 = vmatpush.bf16.msra.mxu0 %v946
        %997 = vmatpush.bf16.msra.mxu0 %v944
        %998 = vmatpush.bf16.msra.mxu0 %v942
        %999 = vmatpush.bf16.msra.mxu0 %v940
        %1000 = vmatpush.bf16.msra.mxu0 %v938
        %1001 = vmatpush.bf16.msra.mxu0 %v936
        %1002 = vmatpush.bf16.msra.mxu0 %v934
        %1003 = vmatpush.bf16.msra.mxu0 %v932
        %1004 = vmatmul.bf16.gmra.mxu0 %v874
        %v1005 = vpop.f32.mrf.mxu0
        %v1006 = vadd.f32 0.0, %v1005
        %v1007 = vpop.f32.mrf.mxu0
        %1008 = vdwg.mxu0
        %1009 = vmatpush.bf16.msra.mxu0 0
        %1010 = vmatpush.bf16.msra.mxu0 0
        %1011 = vmatpush.bf16.msra.mxu0 0
        %1012 = vmatpush.bf16.msra.mxu0 0
        %1013 = vmatpush.bf16.msra.mxu0 0
        %1014 = vmatpush.bf16.msra.mxu0 0
        %1015 = vmatpush.bf16.msra.mxu0 0
        %1016 = vmatpush.bf16.msra.mxu0 %v948
        %1017 = vmatmul.bf16.gmra.mxu0 %v968
        %v1018 = vpop.f32.mrf.mxu0
        %v1019 = vadd.f32 %v1006, %v1018
        %v1020 = vpop.f32.mrf.mxu0
        %1021 = vdwg.mxu0
        %v1022 = vadd.f32 %v824, %v993
        %v1023 = vadd.f32 %v850, %v1019
        %v1024 = vld [vmem:[%s4] sm:$0x3]
        %v1026 = vperm.slane %v1024, 0
        %v1027 = vperm.slane %v1024, 1
        %v1030 = vadd.f32 %v1022, %v1026
        %v1031 = vadd.f32 %v1023, %v1027
        %v1032 = vmax.f32 %v1030, 0.0
        %v1033 = vmax.f32 %v1031, 0.0
        %1034 = vst [vmem:[%s248] sm:$0xff] %v1032
        %1035 = vst [vmem:[%s248 + $0x8] sm:$0xff] %v1033
        %s1036 = sand.u32 %s152, 1
        %s1037 = scalar_lea.sflag [#allocation4], %s1036
        %s1038 = sand.u32 %s152, 1
        %s1039 = smul.addr %s1038, 16
        %s1040 = scalar_lea.vmem [#allocation5], %s1039
        // Predicated region
        $region45: #{tpu_custom_call.1} parent=39 // pred_check
          %p1041 = pneg %p162
        $region46: #{tpu_custom_call.1} parent=39 // pred_check_branch
          %1043 = sbr.rel (%p1041) target = $region48
        $region47: #{tpu_custom_call.1} parent=39 // pred_region
          %1045 = vsyncadd %s1037, 0
          %s1046 = smul.addr %s25, 2
          %s1047 = smul.addr %s24, 4
          %s1048 = sadd.s32 %s1046, %s1047
          %s1049 = smul.addr %s1048, 8
          %s1050 = scalar_lea.hbm %s5, %s1049
          %s1052 = sshll.u32 %s1040, 4
          %s1053 = int_to_ptr.vmem [resolvable:$true] %s1052
          %s1054 = sshll.u32 %s1050, 4
          %s1055 = int_to_ptr.hbm [resolvable:$true] %s1054
          %1057 = dma.vmem_to_hbm [thread:$0]  %s1053, 256, %s1055, %s1037
        $region48: #{tpu_custom_call.1} parent=39 // pred_fallthru
          _
      $region40: #{tpu_custom_call.1} parent=5 // pred_fallthru
        _
      %p1058 = scmp.le.s32.totalorder 2, %s15
      // Predicated region
      $region49: #{tpu_custom_call.1} parent=5 // pred_check
        %p1059 = pneg %p1058
      $region50: #{tpu_custom_call.1} parent=5 // pred_check_branch
        %1061 = sbr.rel (%p1059) target = $region52
      $region51: #{tpu_custom_call.1} parent=5 // pred_region
        %s1062 = ssub.s32 %s15, 2
        // Predicated region
        $region53: #{tpu_custom_call.1} parent=51 // pred_check
          %p1063 = pneg %p168
        $region54: #{tpu_custom_call.1} parent=51 // pred_check_branch
          %1065 = sbr.rel (%p1063) target = $region56
        $region55: #{tpu_custom_call.1} parent=51 // pred_region
          %s1066 = sand.u32 %s153, 1
          %s1067 = scalar_lea.sflag [#allocation4], %s1066
          %s1068 = sand.u32 %s153, 1
          %s1069 = smul.addr %s1068, 16
          %s1070 = scalar_lea.vmem [#allocation5], %s1069
          %1072 = dma.done %s1067, 256
        $region56: #{tpu_custom_call.1} parent=51 // pred_fallthru
          _
      $region52: #{tpu_custom_call.1} parent=5 // pred_fallthru
        _
    $region6: #{tpu_custom_call.1} parent=1 // loop_footer
      %s19 = sadd.s32 1, %s15
    $region7: #{tpu_custom_call.1} parent=1 // loop_footer_branch
      %14 = sbr.rel target = $region3
    $region8: #{tpu_custom_call.1} parent=1 // loop_exit
      _
    %1073 = vsyncpa [#allocation3], 1
    %s1074 = scalar_lea.sflag [#allocation3], 1
    %1075 = vsyncpa %s1074, 1
    %1076 = vsyncpa [#allocation4], 1
    %s1077 = scalar_lea.sflag [#allocation4], 1
    %1078 = vsyncpa %s1077, 1

</llo_original>
